<compile_context>
chip_gen: v7x
topology: tpu7x:2x2x1
jax: 0.10.0
libtpu: 0.0.40
codegen_flags: <defaults>
</compile_context>

<pallas_src>
import functools

import jax
import jax.numpy as jnp
from jax.experimental import pallas as pl
from jax.experimental.pallas import tpu as pltpu


def _round_up(x, m):
    return ((x + m - 1) // m) * m


def _tversky_kernel(pred_ref, tgt_ref, out_ref, tp_ref, sp_ref, cnt_ref, *,
                    alpha, beta, smooth, n_valid, tile_n, needs_mask):
    # pred_ref: (C, TN) logits (native dtype), one spatial tile of one batch
    # tgt_ref:  (1, TN) integer class indices (native narrow dtype)
    # out_ref:  (C, 1)  f32 per-class tversky loss (written at the last tile)
    # tp/sp/cnt_ref: (C, 1) f32 running sums of p*onehot, p, onehot
    t = pl.program_id(1)
    last = pl.num_programs(1) - 1

    @pl.when(t == 0)
    def _init():
        tp_ref[...] = jnp.zeros_like(tp_ref)
        sp_ref[...] = jnp.zeros_like(sp_ref)
        cnt_ref[...] = jnp.zeros_like(cnt_ref)

    logits = pred_ref[...].astype(jnp.float32)               # (C, TN)
    C, TN = logits.shape

    # numerically stable softmax over the class (sublane) axis
    m = jnp.max(logits, axis=0, keepdims=True)               # (1, TN)
    e = jnp.exp(logits - m)                                   # (C, TN)
    denom = jnp.sum(e, axis=0, keepdims=True)                 # (1, TN)
    # EUP approximate reciprocal + one Newton step (rel err ~1e-6, off VALU)
    inv = pl.reciprocal(denom, approx=True)                   # (1, TN)
    inv = inv * (2.0 - denom * inv)
    p = e * inv                                               # (C, TN)

    # one-hot target: onehot[c, n] = (target[n] == c)
    cls_ids = jax.lax.broadcasted_iota(jnp.int32, (C, TN), 0)
    tgt = tgt_ref[...].astype(jnp.int32)                      # (1, TN)
    onehot_b = (tgt == cls_ids)                                # (C, TN) bool

    def _accumulate(p_eff, oh_eff):
        tp_ref[...] += jnp.sum(p_eff * oh_eff, axis=1, keepdims=True)  # (C, 1)
        sp_ref[...] += jnp.sum(p_eff, axis=1, keepdims=True)           # (C, 1)
        cnt_ref[...] += jnp.sum(oh_eff, axis=1, keepdims=True)         # (C, 1)

    if needs_mask:
        # Only the *last* spatial tile has out-of-bounds (garbage) columns;
        # all other tiles accumulate unmasked at full VALU throughput.
        @pl.when(t != last)
        def _acc_full():
            _accumulate(p, onehot_b.astype(jnp.float32))

        @pl.when(t == last)
        def _acc_masked():
            col = t * tile_n + jax.lax.broadcasted_iota(jnp.int32, (1, TN), 1)
            valid = col < n_valid                              # (1, TN) bool
            # where-select (not multiply) so NaN/Inf garbage cannot leak
            p_m = jnp.where(valid, p, 0.0)                     # (C, TN)
            oh_m = jnp.where(jnp.logical_and(valid, onehot_b), 1.0, 0.0)
            _accumulate(p_m, oh_m)
    else:
        _accumulate(p, onehot_b.astype(jnp.float32))

    @pl.when(t == last)
    def _finalize():
        tp = tp_ref[...]
        fp = sp_ref[...] - tp          # == sum(p * (1 - onehot))
        fn = cnt_ref[...] - tp         # == sum((1 - p) * onehot)
        tversky = (tp + smooth) / (tp + alpha * fp + beta * fn + smooth)
        out_ref[...] = 1.0 - tversky


def _choose_tile_n(N, C, pred_itemsize, tile_n=None):
    """Spatial tile (lanes per grid step), multiple of 128.

    Targets ~2 MiB of pred per block (scales with 1/C) so the pipeline runs
    near the HBM roofline, capped so the double-buffered footprint
    (2*pred + 2*target + temporaries) stays comfortably inside v7x's 32 MiB
    scoped VMEM (64 MiB physical)."""
    n_ceil = _round_up(N, 128)
    if tile_n is not None:
        return min(_round_up(tile_n, 128), n_ceil)
    target_pred_bytes = 2 * 1024 * 1024
    max_total_bytes = 24 * 1024 * 1024
    tn = _round_up(max(target_pred_bytes // (C * pred_itemsize), 128), 128)
    per_lane = 2 * C * pred_itemsize + 2 * 4     # double-buffered pred + tgt
    cap = max((max_total_bytes // per_lane) // 128 * 128, 128)
    return min(tn, cap, n_ceil)


def tversky_loss(pred, target, *, alpha=0.3, beta=0.7, smooth=1e-7,
                 reduction="mean", tile_n=None):
    """pred: (B, C, H, W) float logits (any float dtype), target: (B, H, W) int."""
    B, C, H, W = pred.shape
    N = H * W

    pred_itemsize = jnp.dtype(pred.dtype).itemsize
    tn = _choose_tile_n(N, C, pred_itemsize, tile_n)
    n_tiles = pl.cdiv(N, tn)
    needs_mask = (N % tn) != 0

    # No jnp.pad: the grid covers ceil(N/tn) tiles of the unpadded arrays and
    # the ragged last tile is masked in-kernel (saves a full HBM copy of pred).
    pred_flat = pred.reshape(B, C, N)                  # keep native dtype
    tgt = target
    if (not jnp.issubdtype(tgt.dtype, jnp.integer)
            or jnp.dtype(tgt.dtype).itemsize > 4):
        tgt = tgt.astype(jnp.int32)                    # rare path
    tgt_flat = tgt.reshape(B, 1, N)                    # keep narrow int dtype

    kernel = functools.partial(
        _tversky_kernel, alpha=float(alpha), beta=float(beta),
        smooth=float(smooth), n_valid=N, tile_n=tn, needs_mask=needs_mask)

    loss_bc1 = pl.pallas_call(
        kernel,
        out_shape=jax.ShapeDtypeStruct((B, C, 1), jnp.float32),
        grid=(B, n_tiles),
        in_specs=[
            pl.BlockSpec((None, C, tn), lambda b, t: (b, 0, t)),   # pred tile
            pl.BlockSpec((None, 1, tn), lambda b, t: (b, 0, t)),   # target tile
        ],
        out_specs=pl.BlockSpec((None, C, 1), lambda b, t: (b, 0, 0)),
        scratch_shapes=[
            pltpu.VMEM((C, 1), jnp.float32),   # tp  = sum(p * onehot)
            pltpu.VMEM((C, 1), jnp.float32),   # sum(p)
            pltpu.VMEM((C, 1), jnp.float32),   # class count = sum(onehot)
        ],
        compiler_params=pltpu.CompilerParams(
            dimension_semantics=("parallel", "arbitrary"),
            vmem_limit_bytes=32 * 1024 * 1024),
    )(pred_flat, tgt_flat)

    loss = loss_bc1[..., 0]        # (B, C) per-(batch, class) tversky loss
    if reduction == "mean":
        return loss.mean()
    elif reduction == "sum":
        return loss.sum()
    return loss


def _tversky_loss_ref(pred, target, *, alpha=0.3, beta=0.7, smooth=1e-7,
                      reduction="mean"):
    """Pure-JAX reference mirroring the PyTorch forward."""
    B, C, H, W = pred.shape
    p = jax.nn.softmax(pred.astype(jnp.float32), axis=1)
    t = jax.nn.one_hot(target, C, axis=1, dtype=jnp.float32)
    p = p.reshape(B, C, -1)
    t = t.reshape(B, C, -1)
    tp = (p * t).sum(-1)
    fp = (p * (1 - t)).sum(-1)
    fn = ((1 - p) * t).sum(-1)
    tversky = (tp + smooth) / (tp + alpha * fp + beta * fn + smooth)
    loss = 1.0 - tversky
    if reduction == "mean":
        return loss.mean()
    if reduction == "sum":
        return loss.sum()
    return loss


if __name__ == "__main__":
    key = jax.random.PRNGKey(0)
    k1, k2, k3, k4 = jax.random.split(key, 4)

    # Case 1: module-sized example (single spatial tile, no masking).
    B, C, H, W = 2, 4, 16, 16
    pred = jax.random.normal(k1, (B, C, H, W), dtype=jnp.float32)
    target = jax.random.randint(k2, (B, H, W), 0, C, dtype=jnp.int32)

    loss = tversky_loss(pred, target, alpha=0.3, beta=0.7, smooth=1e-7,
                        reduction="mean")
    loss = jax.block_until_ready(loss)
    ref = _tversky_loss_ref(pred, target, alpha=0.3, beta=0.7, smooth=1e-7)
    assert jnp.allclose(loss, ref, atol=1e-5, rtol=1e-5), (loss, ref)

    # Case 2: exercises multi-tile accumulation + ragged last-tile masking
    # without any wrapper padding (N = 18*18 = 324, tile_n = 128 => 3 tiles,
    # last tile has 68 valid of 128 columns).
    H2, W2 = 18, 18
    pred2 = jax.random.normal(k3, (B, C, H2, W2), dtype=jnp.float32)
    target2 = jax.random.randint(k4, (B, H2, W2), 0, C, dtype=jnp.int32)
    loss2 = tversky_loss(pred2, target2, reduction="none", tile_n=128)
    loss2 = jax.block_until_ready(loss2)
    ref2 = _tversky_loss_ref(pred2, target2, reduction="none")
    assert jnp.allclose(loss2, ref2, atol=1e-5, rtol=1e-5), (loss2, ref2)

    # Case 3: native-dtype (bf16) pred path — kernel upcasts internally.
    loss_bf16 = tversky_loss(pred.astype(jnp.bfloat16), target,
                             reduction="mean")
    loss_bf16 = jax.block_until_ready(loss_bf16)
    assert jnp.allclose(loss_bf16, ref, atol=5e-2), (loss_bf16, ref)

    print("KERNEL_OK")
</pallas_src>

<mosaic_0001>
module attributes {stable_mosaic.version = 11 : i64} {
  func.func @_tversky_kernel(%arg0: i32, %arg1: i32, %arg2: memref<1x4x256xf32, #tpu.memory_space<vmem>>, %arg3: memref<1x1x256xi32, #tpu.memory_space<vmem>>, %arg4: memref<1x4x1xf32, #tpu.memory_space<vmem>>, %arg5: memref<4x1xf32, #tpu.memory_space<vmem>>, %arg6: memref<4x1xf32, #tpu.memory_space<vmem>>, %arg7: memref<4x1xf32, #tpu.memory_space<vmem>>) attributes {dimension_semantics = [#tpu.dimension_semantics<parallel>, #tpu.dimension_semantics<arbitrary>], iteration_bounds = array<i64: 2, 1>, scalar_prefetch = 0 : i64, scratch_operands = 3 : i64, tpu.core_type = #tpu.core_type<tc>, window_params = [{transform_indices = @transform_0, window_bounds = array<i64: 1, 4, 256>}, {transform_indices = @transform_1, window_bounds = array<i64: 1, 1, 256>}, {transform_indices = @transform_2, window_bounds = array<i64: 1, 4, 1>}]} {
    %c0_i32 = arith.constant 0 : i32
    %0 = arith.cmpi eq, %arg1, %c0_i32 : i32
    %1 = arith.extui %0 : i1 to i32
    %c0_i32_0 = arith.constant 0 : i32
    %2 = arith.cmpi ne, %1, %c0_i32_0 : i32
    scf.if %2 {
      %cst_25 = arith.constant 0.000000e+00 : f32
      %45 = vector.broadcast %cst_25 : f32 to vector<4x1xf32>
      %c0_26 = arith.constant 0 : index
      %c0_27 = arith.constant 0 : index
      %46 = vector.load %arg5[%c0_26, %c0_27] : memref<4x1xf32, #tpu.memory_space<vmem>>, vector<4x1xf32>
      tpu.vector_store %arg5[%c0_26, %c0_27], %45 {strides = array<i32>} : memref<4x1xf32, #tpu.memory_space<vmem>>, vector<4x1xf32>,
      %cst_28 = arith.constant 0.000000e+00 : f32
      %47 = vector.broadcast %cst_28 : f32 to vector<4x1xf32>
      %c0_29 = arith.constant 0 : index
      %c0_30 = arith.constant 0 : index
      %48 = vector.load %arg6[%c0_29, %c0_30] : memref<4x1xf32, #tpu.memory_space<vmem>>, vector<4x1xf32>
      tpu.vector_store %arg6[%c0_29, %c0_30], %47 {strides = array<i32>} : memref<4x1xf32, #tpu.memory_space<vmem>>, vector<4x1xf32>,
      %cst_31 = arith.constant 0.000000e+00 : f32
      %49 = vector.broadcast %cst_31 : f32 to vector<4x1xf32>
      %c0_32 = arith.constant 0 : index
      %c0_33 = arith.constant 0 : index
      %50 = vector.load %arg7[%c0_32, %c0_33] : memref<4x1xf32, #tpu.memory_space<vmem>>, vector<4x1xf32>
      tpu.vector_store %arg7[%c0_32, %c0_33], %49 {strides = array<i32>} : memref<4x1xf32, #tpu.memory_space<vmem>>, vector<4x1xf32>,
    } else {
    }
    %c0 = arith.constant 0 : index
    %c0_1 = arith.constant 0 : index
    %c0_2 = arith.constant 0 : index
    %3 = vector.load %arg2[%c0, %c0_1, %c0_2] : memref<1x4x256xf32, #tpu.memory_space<vmem>>, vector<1x4x256xf32>
    %4 = vector.shape_cast %3 : vector<1x4x256xf32> to vector<4x256xf32>
    %cst = arith.constant dense<0xFF800000> : vector<256xf32>
    %5 = vector.multi_reduction <maximumf>, %4, %cst [0] : vector<4x256xf32> to vector<256xf32>
    %6 = vector.shape_cast %5 : vector<256xf32> to vector<1x256xf32>
    %7 = vector.broadcast %6 : vector<1x256xf32> to vector<4x256xf32>
    %8 = arith.subf %4, %7 : vector<4x256xf32>
    %9 = math.exp %8 : vector<4x256xf32>
    %cst_3 = arith.constant dense<0.000000e+00> : vector<256xf32>
    %10 = vector.multi_reduction <add>, %9, %cst_3 [0] : vector<4x256xf32> to vector<256xf32>
    %11 = vector.shape_cast %10 : vector<256xf32> to vector<1x256xf32>
    %12 = tpu.reciprocal %11 {approx = true} : vector<1x256xf32> -> vector<1x256xf32>
    %13 = arith.mulf %11, %12 : vector<1x256xf32>
    %cst_4 = arith.constant 2.000000e+00 : f32
    %14 = vector.broadcast %cst_4 : f32 to vector<1x256xf32>
    %15 = arith.subf %14, %13 : vector<1x256xf32>
    %16 = arith.mulf %12, %15 : vector<1x256xf32>
    %17 = vector.broadcast %16 : vector<1x256xf32> to vector<4x256xf32>
    %18 = arith.mulf %9, %17 : vector<4x256xf32>
    %19 = tpu.iota {dimensions = array<i32: 0>} : vector<4x256xi32>
    %c0_5 = arith.constant 0 : index
    %c0_6 = arith.constant 0 : index
    %c0_7 = arith.constant 0 : index
    %20 = vector.load %arg3[%c0_5, %c0_6, %c0_7] : memref<1x1x256xi32, #tpu.memory_space<vmem>>, vector<1x1x256xi32>
    %21 = vector.shape_cast %20 : vector<1x1x256xi32> to vector<1x256xi32>
    %22 = vector.broadcast %21 : vector<1x256xi32> to vector<4x256xi32>
    %23 = arith.cmpi eq, %22, %19 : vector<4x256xi32>
    %24 = arith.extui %23 : vector<4x256xi1> to vector<4x256xi32>
    %25 = arith.sitofp %24 : vector<4x256xi32> to vector<4x256xf32>
    %c0_8 = arith.constant 0 : index
    %c0_9 = arith.constant 0 : index
    %26 = vector.load %arg5[%c0_8, %c0_9] : memref<4x1xf32, #tpu.memory_space<vmem>>, vector<4x1xf32>
    %27 = arith.mulf %18, %25 : vector<4x256xf32>
    %cst_10 = arith.constant dense<0.000000e+00> : vector<4xf32>
    %28 = vector.multi_reduction <add>, %27, %cst_10 [1] : vector<4x256xf32> to vector<4xf32>
    %29 = vector.shape_cast %28 : vector<4xf32> to vector<4x1xf32>
    %30 = arith.addf %26, %29 : vector<4x1xf32>
    %c0_11 = arith.constant 0 : index
    %c0_12 = arith.constant 0 : index
    %31 = vector.load %arg5[%c0_11, %c0_12] : memref<4x1xf32, #tpu.memory_space<vmem>>, vector<4x1xf32>
    tpu.vector_store %arg5[%c0_11, %c0_12], %30 {strides = array<i32>} : memref<4x1xf32, #tpu.memory_space<vmem>>, vector<4x1xf32>,
    %c0_13 = arith.constant 0 : index
    %c0_14 = arith.constant 0 : index
    %32 = vector.load %arg6[%c0_13, %c0_14] : memref<4x1xf32, #tpu.memory_space<vmem>>, vector<4x1xf32>
    %cst_15 = arith.constant dense<0.000000e+00> : vector<4xf32>
    %33 = vector.multi_reduction <add>, %18, %cst_15 [1] : vector<4x256xf32> to vector<4xf32>
    %34 = vector.shape_cast %33 : vector<4xf32> to vector<4x1xf32>
    %35 = arith.addf %32, %34 : vector<4x1xf32>
    %c0_16 = arith.constant 0 : index
    %c0_17 = arith.constant 0 : index
    %36 = vector.load %arg6[%c0_16, %c0_17] : memref<4x1xf32, #tpu.memory_space<vmem>>, vector<4x1xf32>
    tpu.vector_store %arg6[%c0_16, %c0_17], %35 {strides = array<i32>} : memref<4x1xf32, #tpu.memory_space<vmem>>, vector<4x1xf32>,
    %c0_18 = arith.constant 0 : index
    %c0_19 = arith.constant 0 : index
    %37 = vector.load %arg7[%c0_18, %c0_19] : memref<4x1xf32, #tpu.memory_space<vmem>>, vector<4x1xf32>
    %cst_20 = arith.constant dense<0.000000e+00> : vector<4xf32>
    %38 = vector.multi_reduction <add>, %25, %cst_20 [1] : vector<4x256xf32> to vector<4xf32>
    %39 = vector.shape_cast %38 : vector<4xf32> to vector<4x1xf32>
    %40 = arith.addf %37, %39 : vector<4x1xf32>
    %c0_21 = arith.constant 0 : index
    %c0_22 = arith.constant 0 : index
    %41 = vector.load %arg7[%c0_21, %c0_22] : memref<4x1xf32, #tpu.memory_space<vmem>>, vector<4x1xf32>
    tpu.vector_store %arg7[%c0_21, %c0_22], %40 {strides = array<i32>} : memref<4x1xf32, #tpu.memory_space<vmem>>, vector<4x1xf32>,
    %c0_i32_23 = arith.constant 0 : i32
    %42 = arith.cmpi eq, %arg1, %c0_i32_23 : i32
    %43 = arith.extui %42 : i1 to i32
    %c0_i32_24 = arith.constant 0 : i32
    %44 = arith.cmpi ne, %43, %c0_i32_24 : i32
    scf.if %44 {
      %c0_25 = arith.constant 0 : index
      %c0_26 = arith.constant 0 : index
      %45 = vector.load %arg5[%c0_25, %c0_26] : memref<4x1xf32, #tpu.memory_space<vmem>>, vector<4x1xf32>
      %c0_27 = arith.constant 0 : index
      %c0_28 = arith.constant 0 : index
      %46 = vector.load %arg6[%c0_27, %c0_28] : memref<4x1xf32, #tpu.memory_space<vmem>>, vector<4x1xf32>
      %47 = arith.subf %46, %45 : vector<4x1xf32>
      %c0_29 = arith.constant 0 : index
      %c0_30 = arith.constant 0 : index
      %48 = vector.load %arg7[%c0_29, %c0_30] : memref<4x1xf32, #tpu.memory_space<vmem>>, vector<4x1xf32>
      %49 = arith.subf %48, %45 : vector<4x1xf32>
      %cst_31 = arith.constant 1.000000e-07 : f32
      %50 = vector.broadcast %cst_31 : f32 to vector<4x1xf32>
      %51 = arith.addf %45, %50 : vector<4x1xf32>
      %cst_32 = arith.constant 3.000000e-01 : f32
      %52 = vector.broadcast %cst_32 : f32 to vector<4x1xf32>
      %53 = arith.mulf %52, %47 : vector<4x1xf32>
      %54 = arith.addf %45, %53 : vector<4x1xf32>
      %cst_33 = arith.constant 0.699999988 : f32
      %55 = vector.broadcast %cst_33 : f32 to vector<4x1xf32>
      %56 = arith.mulf %55, %49 : vector<4x1xf32>
      %57 = arith.addf %54, %56 : vector<4x1xf32>
      %cst_34 = arith.constant 1.000000e-07 : f32
      %58 = vector.broadcast %cst_34 : f32 to vector<4x1xf32>
      %59 = arith.addf %57, %58 : vector<4x1xf32>
      %60 = arith.divf %51, %59 : vector<4x1xf32>
      %cst_35 = arith.constant 1.000000e+00 : f32
      %61 = vector.broadcast %cst_35 : f32 to vector<4x1xf32>
      %62 = arith.subf %61, %60 : vector<4x1xf32>
      %c0_36 = arith.constant 0 : index
      %c0_37 = arith.constant 0 : index
      %c0_38 = arith.constant 0 : index
      %63 = vector.load %arg4[%c0_36, %c0_37, %c0_38] : memref<1x4x1xf32, #tpu.memory_space<vmem>>, vector<1x4x1xf32>
      %64 = vector.shape_cast %63 : vector<1x4x1xf32> to vector<4x1xf32>
      %65 = vector.shape_cast %62 : vector<4x1xf32> to vector<1x4x1xf32>
      tpu.vector_store %arg4[%c0_36, %c0_37, %c0_38], %65 {strides = array<i32>} : memref<1x4x1xf32, #tpu.memory_space<vmem>>, vector<1x4x1xf32>,
    } else {
    }
    return
  }
  func.func @transform_0(%arg0: i32, %arg1: i32) -> (i32, i32, i32) {
    %c0_i32 = arith.constant 0 : i32
    %c0_i32_0 = arith.constant 0 : i32
    return %arg0, %c0_i32, %arg1 : i32, i32, i32
  }
  func.func @transform_1(%arg0: i32, %arg1: i32) -> (i32, i32, i32) {
    %c0_i32 = arith.constant 0 : i32
    %c0_i32_0 = arith.constant 0 : i32
    return %arg0, %c0_i32, %arg1 : i32, i32, i32
  }
  func.func @transform_2(%arg0: i32, %arg1: i32) -> (i32, i32, i32) {
    %c0_i32 = arith.constant 0 : i32
    %c0_i32_0 = arith.constant 0 : i32
    %c0_i32_1 = arith.constant 0 : i32
    return %arg0, %c0_i32, %c0_i32_0 : i32, i32, i32
  }
}

</mosaic_0001>

<llo_original>
// kernel: tpu_custom_call.1
$region0: #{tpu_custom_call.1}
  #allocation0 [shape = 'u32[]', space=smem, size = 0x4, offset = 0x4, fixed_abs, tag = 'smem constant byte address 0x4 - core index']
  #allocation1 [shape = 'u32[144,128]{1,0:T(1,128)}', space=vmem, size = 0x12000, scoped, tag = 'internal scratch']
  #allocation2 [shape = 'f32[4,1]{1,0:T(4,128)}', space=vmem, size = 0x800, scoped, tag = 'scratch operand']
  #allocation3 [shape = 'f32[4,1]{1,0:T(4,128)}', space=vmem, size = 0x800, scoped, tag = 'scratch operand']
  #allocation4 [shape = 'f32[4,1]{1,0:T(4,128)}', space=vmem, size = 0x800, scoped, tag = 'scratch operand']
  %s0 = inlined_call_operand.hbm [shape: f32[2,4,256], index: 0, kind: input, shape index: {}]
  %s1 = inlined_call_operand.hbm [shape: s32[2,1,256], index: 1, kind: input, shape index: {}]
  %s2 = inlined_call_operand.vmem [shape: f32[2,4,1], index: 2, kind: output, shape index: {}]
  %s3 = sld [smem:[#allocation0]]
  $region57: #{tpu_custom_call.1} parent=0
    _
  %s5 = ssub.s32 1, %s3
  %s6 = scalar_select 0, %s5, %s3
  $region1: #{tpu_custom_call.1} parent=0
    #allocation5 [shape = 'u8[8192]{0}', space=vmem, size = 0x2000, scoped, tag = 'input window, operand 0']
    #allocation6 [shape = 's32[2]{0}', space=sflag, size = 0x8, scoped, tag = 'scoped memory for tpu_custom_call.1']
    #allocation7 [shape = 'u8[2048]{0}', space=vmem, size = 0x800, scoped, tag = 'input window, operand 1']
    #allocation8 [shape = 's32[2]{0}', space=sflag, size = 0x8, scoped, tag = 'scoped memory for tpu_custom_call.1']
    %7 = vsyncpa [#allocation6], 0
    %s8 = scalar_lea.sflag [#allocation6], 1
    %9 = vsyncpa %s8, 0
    %10 = vsyncpa [#allocation8], 0
    %s11 = scalar_lea.sflag [#allocation8], 1
    %12 = vsyncpa %s11, 0
    loop: start=0, step=1, limit=4
    $region2: #{tpu_custom_call.1} parent=1 // loop_pre_header
      _
    $region3: #{tpu_custom_call.1} parent=1 // loop_header
      %s14 = sphi 0, %s18
      %p15 = scmp.ge.s32.totalorder %s14, 4
      %s21 = sphi 0, %s33
      %s22 = sphi 0, %s29
      %s23 = sphi 0, %s21
      %s24 = sphi 0, %s22
      %s25 = sphi 0, %s23
      %s26 = sphi 0, %s24
      %s38 = sphi 0, %s40
      %s41 = sphi 0, %s38
      %s42 = sphi 0, %s41
      %s58 = sphi 0, %s42
      %s66 = sphi 0, %s68
      %s69 = sphi 0, %s66
      %s70 = sphi 0, %s69
      %s86 = sphi 0, %s70
      %s92 = sphi 0, %s94
      %s95 = sphi 0, %s92
      %s96 = sphi 0, %s95
      %s112 = sphi 0, %s96
    $region4: #{tpu_custom_call.1} parent=1 // loop_header_branch
      %17 = sbr.rel (%p15) target = $region8
    $region5: #{tpu_custom_call.1} parent=1 // loop_body
      %s19 = ssub.s32 %s14, 1
      %s20 = ssub.s32 %s14, 2
      %s27 = sadd.s32 1, %s22
      %p28 = scmp.ge.s32.totalorder %s27, 1
      %s29 = scalar_select %p28, 0, %s27
      %s30 = sadd.s32 1, %s21
      %s31 = scalar_select %p28, %s30, %s21
      %p32 = scmp.ge.s32.totalorder %s31, 2
      %s33 = scalar_select %p32, 0, %s31
      %s34 = ssub.s32 %s21, %s33
      %s35 = ssub.s32 %s22, %s29
      %s36 = sor.u32 %s34, %s35
      %p37 = scmp.eq.s32.totalorder %s36, 0
      %s39 = sadd.s32 %s38, 1
      %s40 = scalar_select %p37, %s38, %s39
      %p43 = pneg %p37
      %p44 = scmp.eq.s32.totalorder %s14, 1
      %p45 = por %p43, %p44
      %p46 = scmp.ne.s32.totalorder %s38, %s41
      %p47 = scmp.eq.s32.totalorder %s14, 0
      %p48 = por %p46, %p47
      %p49 = scmp.ne.s32.totalorder %s38, %s41
      %p50 = scmp.eq.s32.totalorder %s19, 1
      %p51 = por %p49, %p50
      %p52 = scmp.ne.s32.totalorder %s41, %s42
      %p53 = scmp.eq.s32.totalorder %s19, 0
      %p54 = por %p52, %p53
      %p55 = scmp.ne.s32.totalorder %s41, %s42
      %p56 = scmp.eq.s32.totalorder %s20, 1
      %p57 = por %p55, %p56
      %p59 = scmp.ne.s32.totalorder %s42, %s58
      %p60 = scmp.eq.s32.totalorder %s20, 0
      %p61 = por %p59, %p60
      %s62 = ssub.s32 %s21, %s33
      %s63 = ssub.s32 %s22, %s29
      %s64 = sor.u32 %s62, %s63
      %p65 = scmp.eq.s32.totalorder %s64, 0
      %s67 = sadd.s32 %s66, 1
      %s68 = scalar_select %p65, %s66, %s67
      %p71 = pneg %p65
      %p72 = scmp.eq.s32.totalorder %s14, 1
      %p73 = por %p71, %p72
      %p74 = scmp.ne.s32.totalorder %s66, %s69
      %p75 = scmp.eq.s32.totalorder %s14, 0
      %p76 = por %p74, %p75
      %p77 = scmp.ne.s32.totalorder %s66, %s69
      %p78 = scmp.eq.s32.totalorder %s19, 1
      %p79 = por %p77, %p78
      %p80 = scmp.ne.s32.totalorder %s69, %s70
      %p81 = scmp.eq.s32.totalorder %s19, 0
      %p82 = por %p80, %p81
      %p83 = scmp.ne.s32.totalorder %s69, %s70
      %p84 = scmp.eq.s32.totalorder %s20, 1
      %p85 = por %p83, %p84
      %p87 = scmp.ne.s32.totalorder %s70, %s86
      %p88 = scmp.eq.s32.totalorder %s20, 0
      %p89 = por %p87, %p88
      %s90 = ssub.s32 %s21, %s33
      %p91 = scmp.eq.s32.totalorder %s90, 0
      %s93 = sadd.s32 %s92, 1
      %s94 = scalar_select %p91, %s92, %s93
      %p97 = pneg %p91
      %p98 = scmp.eq.s32.totalorder %s14, 1
      %p99 = por %p97, %p98
      %p100 = scmp.ne.s32.totalorder %s92, %s95
      %p101 = scmp.eq.s32.totalorder %s14, 0
      %p102 = por %p100, %p101
      %p103 = scmp.ne.s32.totalorder %s92, %s95
      %p104 = scmp.eq.s32.totalorder %s19, 1
      %p105 = por %p103, %p104
      %p106 = scmp.ne.s32.totalorder %s95, %s96
      %p107 = scmp.eq.s32.totalorder %s19, 0
      %p108 = por %p106, %p107
      %p109 = scmp.ne.s32.totalorder %s95, %s96
      %p110 = scmp.eq.s32.totalorder %s20, 1
      %p111 = por %p109, %p110
      %p113 = scmp.ne.s32.totalorder %s96, %s112
      %p114 = scmp.eq.s32.totalorder %s20, 0
      %p115 = por %p113, %p114
      %p116 = scmp.le.s32.totalorder 1, %s14
      %p117 = scmp.lt.s32.totalorder %s14, 3
      %p118 = pnand %p116, %p117
      %p119 = pneg %p118
      // Predicated region
      $region9: #{tpu_custom_call.1} parent=5 // pred_check
        _
      $region10: #{tpu_custom_call.1} parent=5 // pred_check_branch
        %121 = sbr.rel (%p118) target = $region12
      $region11: #{tpu_custom_call.1} parent=5 // pred_region
        %s122 = ssub.s32 %s14, 1
      $region12: #{tpu_custom_call.1} parent=5 // pred_fallthru
        _
      %p123 = scmp.lt.s32.totalorder %s14, 2
      // Predicated region
      $region13: #{tpu_custom_call.1} parent=5 // pred_check
        %p124 = pneg %p123
      $region14: #{tpu_custom_call.1} parent=5 // pred_check_branch
        %126 = sbr.rel (%p124) target = $region16
      $region15: #{tpu_custom_call.1} parent=5 // pred_region
        // Predicated region
        $region17: #{tpu_custom_call.1} parent=15 // pred_check
          %p127 = pneg %p48
        $region18: #{tpu_custom_call.1} parent=15 // pred_check_branch
          %129 = sbr.rel (%p127) target = $region20
        $region19: #{tpu_custom_call.1} parent=15 // pred_region
          %s130 = sand.u32 %s38, 1
          %s131 = scalar_lea.sflag [#allocation6], %s130
          %s132 = sand.u32 %s38, 1
          %s133 = smul.addr %s132, 8
          %s134 = scalar_lea.vmem [#allocation5], %s133
          %s135 = smul.u32 2, %s22
          %s137 = ssub.s32 128, 128
          %138 = vsyncadd %s131, %s137
          %s139 = smul.addr %s21, 2
          %s140 = sadd.s32 %s135, %s139
          %s141 = smul.addr %s140, 64
          %s142 = scalar_lea.hbm %s0, %s141
          %s144 = sshll.u32 %s134, 4
          %s145 = int_to_ptr.vmem [resolvable:$true] %s144
          %147 = dma.hbm_to_vmem [thread:$0]  %s142, 128, %s145, %s131
        $region20: #{tpu_custom_call.1} parent=15 // pred_fallthru
          _
        // Predicated region
        $region21: #{tpu_custom_call.1} parent=15 // pred_check
          %p148 = pneg %p76
        $region22: #{tpu_custom_call.1} parent=15 // pred_check_branch
          %150 = sbr.rel (%p148) target = $region24
        $region23: #{tpu_custom_call.1} parent=15 // pred_region
          %s151 = sand.u32 %s66, 1
          %s152 = scalar_lea.sflag [#allocation8], %s151
          %s153 = sand.u32 %s66, 1
          %s154 = smul.addr %s153, 2
          %s155 = scalar_lea.vmem [#allocation7], %s154
          %s156 = smul.u32 2, %s22
          %s158 = ssub.s32 32, 32
          %159 = vsyncadd %s152, %s158
          %s160 = smul.addr %s21, 2
          %s161 = sadd.s32 %s156, %s160
          %s162 = smul.addr %s161, 16
          %s163 = scalar_lea.hbm %s1, %s162
          %s165 = sshll.u32 %s155, 4
          %s166 = int_to_ptr.vmem [resolvable:$true] %s165
          %168 = dma.hbm_to_vmem [thread:$0]  %s163, 32, %s166, %s152
        $region24: #{tpu_custom_call.1} parent=15 // pred_fallthru
          _
      $region16: #{tpu_custom_call.1} parent=5 // pred_fallthru
        _
      %p169 = scmp.le.s32.totalorder 1, %s14
      %p170 = scmp.lt.s32.totalorder %s14, 3
      %p171 = pnand %p169, %p170
      %p172 = pneg %p171
      // Predicated region
      $region25: #{tpu_custom_call.1} parent=5 // pred_check
        _
      $region26: #{tpu_custom_call.1} parent=5 // pred_check_branch
        %174 = sbr.rel (%p171) target = $region28
      $region27: #{tpu_custom_call.1} parent=5 // pred_region
        %s175 = ssub.s32 %s14, 1
        %s176 = sand.u32 %s41, 1
        %s177 = scalar_lea.sflag [#allocation6], %s176
        %s178 = sand.u32 %s41, 1
        %s179 = smul.addr %s178, 8
        %s180 = scalar_lea.vmem [#allocation5], %s179
        // Predicated region
        $region29: #{tpu_custom_call.1} parent=27 // pred_check
          %p181 = pneg %p54
        $region30: #{tpu_custom_call.1} parent=27 // pred_check_branch
          %183 = sbr.rel (%p181) target = $region32
        $region31: #{tpu_custom_call.1} parent=27 // pred_region
          %184 = dma.done %s177, 128
        $region32: #{tpu_custom_call.1} parent=27 // pred_fallthru
          _
        %s185 = sand.u32 %s69, 1
        %s186 = scalar_lea.sflag [#allocation8], %s185
        %s187 = sand.u32 %s69, 1
        %s188 = smul.addr %s187, 2
        %s189 = scalar_lea.vmem [#allocation7], %s188
        // Predicated region
        $region33: #{tpu_custom_call.1} parent=27 // pred_check
          %p190 = pneg %p82
        $region34: #{tpu_custom_call.1} parent=27 // pred_check_branch
          %192 = sbr.rel (%p190) target = $region36
        $region35: #{tpu_custom_call.1} parent=27 // pred_region
          %193 = dma.done %s186, 32
        $region36: #{tpu_custom_call.1} parent=27 // pred_fallthru
          _
        %s194 = sand.u32 %s41, 1
        %s195 = scalar_lea.sflag [#allocation6], %s194
        %s196 = sand.u32 %s41, 1
        %s197 = smul.addr %s196, 8
        %s198 = scalar_lea.vmem [#allocation5], %s197
        %p199 = pneg %p54
        %p200 = pneg %p51
        %s201 = sand.u32 %s69, 1
        %s202 = scalar_lea.sflag [#allocation8], %s201
        %s203 = sand.u32 %s69, 1
        %s204 = smul.addr %s203, 2
        %s205 = scalar_lea.vmem [#allocation7], %s204
        %p206 = pneg %p82
        %p207 = pneg %p79
        %p208 = pneg %p108
        %p209 = pneg %p105
        %p210 = scmp.lt.s32.totalorder %s23, 1
        %s211 = scalar_select %p210, %s23, 1
        %s212 = smul.addr %s211, 4
        %s213 = scalar_lea.vmem %s2, %s212
        %s214 = smul.u32 2, %s24
        %s215 = smul.u32 2, %s24
        %p216 = scmp.lt.s32.totalorder %s23, 1
        %s217 = scalar_select %p216, %s23, 1
        %s218 = smul.addr %s217, 4
        %s219 = scalar_lea.vmem %s2, %s218
        %p220 = scmp.eq.s32.totalorder %s24, 0
        // Predicated region
        $region37: #{tpu_custom_call.1} parent=27 // pred_check
          %p221 = pneg %p220
        $region38: #{tpu_custom_call.1} parent=27 // pred_check_branch
          %223 = sbr.rel (%p221) target = $region40
        $region39: #{tpu_custom_call.1} parent=27 // pred_region
          %vm224 = vcmask 3072
          %225 = vst.msk [vmem:[#allocation2] sm:$0xf] %vm224, 0.0
          %226 = vst.msk [vmem:[#allocation3] sm:$0xf] %vm224, 0.0
          %227 = vst.msk [vmem:[#allocation4] sm:$0xf] %vm224, 0.0
        $region40: #{tpu_custom_call.1} parent=27 // pred_fallthru
          _
        %v228 = vld [vmem:[%s180] sm:$0xff]
        %v230 = vcombine.high %v228, %v228
        %vm232 = vcmask 1043456
        %v233 = vsel %vm232, %v228, -inf
        %v234 = vrot.slane %v233, 4
        %v235 = vmax.f32 %v233, %v234
        %v236 = vrot.slane %v235, 2
        %v237 = vmax.f32 %v235, %v236
        %v238 = vrot.slane %v237, 1
        %v239 = vmax.f32 %v237, %v238
        %v240 = vsel %vm232, %v230, -inf
        %v241 = vrot.slane %v240, 4
        %v242 = vmax.f32 %v240, %v241
        %v243 = vrot.slane %v242, 2
        %v244 = vmax.f32 %v242, %v243
        %v245 = vrot.slane %v244, 1
        %v246 = vmax.f32 %v244, %v245
        %v249 = vcombine.low %v239, %v246
        %v251 = vsub.f32 %v228, %v249
        %v252 = vmul.f32 %v251, 1.442695
        %v253 = vpow.pop %v252
        %v255 = vcombine.high %v253, %v253
        %v257 = vsel %vm232, %v253, 0.0
        %v258 = vrot.slane %v257, 4
        %v259 = vadd.f32 %v257, %v258
        %v260 = vrot.slane %v259, 2
        %v261 = vadd.f32 %v259, %v260
        %v262 = vrot.slane %v261, 1
        %v263 = vadd.f32 %v261, %v262
        %v264 = vsel %vm232, %v255, 0.0
        %v265 = vrot.slane %v264, 4
        %v266 = vadd.f32 %v264, %v265
        %v267 = vrot.slane %v266, 2
        %v268 = vadd.f32 %v266, %v267
        %v269 = vrot.slane %v268, 1
        %v270 = vadd.f32 %v268, %v269
        %v271 = vrcp.pop %v263
        %v272 = vrcp.pop %v270
        %v273 = vmul.f32 %v263, %v271
        %v274 = vmul.f32 %v270, %v272
        %v275 = vsub.f32 2.0, %v273
        %v276 = vsub.f32 2.0, %v274
        %v277 = vmul.f32 %v271, %v275
        %v278 = vmul.f32 %v272, %v276
        %v281 = vcombine.low %v277, %v278
        %v283 = vmul.f32 %v253, %v281
        %v284 = vlaneseq
        %v285 = vshrl.u32 %v284, 7
        %v286 = vld [vmem:[%s189] sm:$0x3]
        %v287 = vlaneseq
        %v288 = vshrl.u32 %v287, 7
        %v289 = vsub.s32 0, %v288
        %v290 = vrot.slane %v286, %v289
        %v291 = vlaneseq
        %v292 = vshrl.u32 %v291, 7
        %v293 = vsub.s32 1, %v292
        %v294 = vrot.slane %v286, %v293
        %vm295 = vcmp.eq.s32.totalorder %v290, %v285
        %vm296 = vcmp.eq.s32.totalorder %v294, %v285
        %v297 = vsel %vm295, 1, 0
        %v298 = vsel %vm296, 1, 0
        %v299 = vcvt.s32.f32 %v297
        %v300 = vcvt.s32.f32 %v298
        %v301 = vld [vmem:[#allocation2] sm:$0xf]
        %v304 = vcombine.low %v299, %v300
        %v306 = vmul.f32 %v283, %v304
        %v308 = vcombine.high %v306, %v306
        %v310 = vsel %vm232, %v306, 0.0
        %v311 = vsel %vm232, %v308, 0.0
        %v312 = vadd.f32 %v310, %v311
        %313 = vadd.xlane.f32.xlu0 %v312
        %v314 = vpop.xlane.xlu0 %313
        %v315 = vadd.f32 %v301, %v314
        %vm316 = vcmask 3072
        %317 = vst.msk [vmem:[#allocation2] sm:$0xf] %vm316, %v315
        %v318 = vld [vmem:[#allocation3] sm:$0xf]
        %v320 = vcombine.high %v283, %v283
        %v322 = vsel %vm232, %v283, 0.0
        %v323 = vsel %vm232, %v320, 0.0
        %v324 = vadd.f32 %v322, %v323
        %325 = vadd.xlane.f32.xlu0 %v324
        %v326 = vpop.xlane.xlu0 %325
        %v327 = vadd.f32 %v318, %v326
        %328 = vst.msk [vmem:[#allocation3] sm:$0xf] %vm316, %v327
        %v329 = vld [vmem:[#allocation4] sm:$0xf]
        %v330 = vsel %vm232, %v299, 0.0
        %v331 = vsel %vm232, %v300, 0.0
        %v332 = vadd.f32 %v330, %v331
        %333 = vadd.xlane.f32.xlu0 %v332
        %v334 = vpop.xlane.xlu0 %333
        %v335 = vadd.f32 %v329, %v334
        %336 = vst.msk [vmem:[#allocation4] sm:$0xf] %vm316, %v335
        // Predicated region
        $region41: #{tpu_custom_call.1} parent=27 // pred_check
          %p337 = pneg %p220
        $region42: #{tpu_custom_call.1} parent=27 // pred_check_branch
          %339 = sbr.rel (%p337) target = $region44
        $region43: #{tpu_custom_call.1} parent=27 // pred_region
          %v340 = vld [vmem:[#allocation2] sm:$0xf]
          %v341 = vld [vmem:[#allocation3] sm:$0xf]
          %v342 = vsub.f32 %v341, %v340
          %v343 = vld [vmem:[#allocation4] sm:$0xf]
          %v344 = vsub.f32 %v343, %v340
          %v345 = vadd.f32 %v340, 1e-07
          %v346 = vmul.f32 %v342, 0.3
          %v347 = vadd.f32 %v340, %v346
          %v348 = vmul.f32 %v344, 0.7
          %v349 = vadd.f32 %v347, %v348
          %v350 = vadd.f32 %v349, 1e-07
          %v351 = vrcp.pop %v350
          %v352 = vmul.f32 %v345, %v351
          %v353 = vsub.f32 1.0, %v352
          %354 = vst.msk [vmem:[%s219] sm:$0xf] %vm316, %v353
        $region44: #{tpu_custom_call.1} parent=27 // pred_fallthru
          _
        %p355 = scmp.lt.s32.totalorder %s23, 1
        %s356 = scalar_select %p355, %s23, 1
        %s357 = smul.addr %s356, 4
        %s358 = scalar_lea.vmem %s2, %s357
        // Predicated region
        $region45: #{tpu_custom_call.1} parent=27 // pred_check
          %p359 = pneg %p105
        $region46: #{tpu_custom_call.1} parent=27 // pred_check_branch
          %361 = sbr.rel (%p359) target = $region48
        $region47: #{tpu_custom_call.1} parent=27 // pred_region
          _
        $region48: #{tpu_custom_call.1} parent=27 // pred_fallthru
          _
      $region28: #{tpu_custom_call.1} parent=5 // pred_fallthru
        _
      %p362 = scmp.le.s32.totalorder 2, %s14
      // Predicated region
      $region49: #{tpu_custom_call.1} parent=5 // pred_check
        %p363 = pneg %p362
      $region50: #{tpu_custom_call.1} parent=5 // pred_check_branch
        %365 = sbr.rel (%p363) target = $region52
      $region51: #{tpu_custom_call.1} parent=5 // pred_region
        %s366 = ssub.s32 %s14, 2
        // Predicated region
        $region53: #{tpu_custom_call.1} parent=51 // pred_check
          %p367 = pneg %p111
        $region54: #{tpu_custom_call.1} parent=51 // pred_check_branch
          %369 = sbr.rel (%p367) target = $region56
        $region55: #{tpu_custom_call.1} parent=51 // pred_region
          %p370 = scmp.lt.s32.totalorder %s25, 1
          %s371 = scalar_select %p370, %s25, 1
          %s372 = smul.addr %s371, 4
          %s373 = scalar_lea.vmem %s2, %s372
        $region56: #{tpu_custom_call.1} parent=51 // pred_fallthru
          _
      $region52: #{tpu_custom_call.1} parent=5 // pred_fallthru
        _
    $region6: #{tpu_custom_call.1} parent=1 // loop_footer
      %s18 = sadd.s32 1, %s14
    $region7: #{tpu_custom_call.1} parent=1 // loop_footer_branch
      %13 = sbr.rel target = $region3
    $region8: #{tpu_custom_call.1} parent=1 // loop_exit
      _
    %374 = vsyncpa [#allocation6], 1
    %s375 = scalar_lea.sflag [#allocation6], 1
    %376 = vsyncpa %s375, 1
    %377 = vsyncpa [#allocation8], 1
    %s378 = scalar_lea.sflag [#allocation8], 1
    %379 = vsyncpa %s378, 1

</llo_original>
